<compile_context>
chip_gen: v7x
topology: tpu7x:2x2x1
jax: 0.10.0
libtpu: 0.0.40
codegen_flags: <defaults>
</compile_context>

<pallas_src>
import jax
import jax.numpy as jnp
from jax.experimental import pallas as pl
from jax.experimental.pallas import tpu as pltpu

# Compile-time color-conversion constants (become VPU immediates).
_KR, _KG, _KB = 0.299, 0.587, 0.114
_MATRIX = (
    (_KR, _KG, _KB),
    (-0.5 * _KR / (1.0 - _KB), -0.5 * _KG / (1.0 - _KB), 0.5),
    (0.5, -0.5 * _KG / (1.0 - _KR), -0.5 * _KB / (1.0 - _KR)),
)
_SHIFT = (0.0, 0.5, 0.5)

_LANE = 128
_MIN_TOTAL_STEPS = 8  # target pipeline depth (total grid steps) per call


def _rgb2ycbcr_kernel(x_ref, o_ref):
    # x_ref / o_ref: (3, TILE_P, L) in VMEM (batch dim squeezed by the BlockSpec).
    # Mix computed in f32 regardless of storage dtype: casts are free, the
    # kernel is HBM-bound and the VPU has huge slack under the DMAs.
    r = x_ref[0].astype(jnp.float32)
    g = x_ref[1].astype(jnp.float32)
    b = x_ref[2].astype(jnp.float32)
    # Tiny fixed 3x3 "matmul" unrolled as per-channel VPU multiply-adds with
    # immediate coefficients. Deliberately NOT an MXU dot (<0.1% utilization
    # and the kernel is HBM-bound anyway).
    for j in range(3):
        m0, m1, m2 = _MATRIX[j]
        o_ref[j] = (m0 * r + m1 * g + m2 * b + _SHIFT[j]).astype(o_ref.dtype)


def _vmem_capacity_bytes():
    try:
        return int(pltpu.get_tpu_info().vmem_capacity_bytes)
    except Exception:
        return 128 * 1024 * 1024  # v5e/v6e default


def _sublane_align(itemsize):
    # f32 -> 8, bf16 -> 16, int8/fp8 -> 32 (sub-32-bit dtypes pack along sublanes).
    return max(8, 32 // max(1, itemsize))


def _choose_lane_layout(n, min_rows):
    """Pick (P, L) with P * L == n and L a multiple of 128.

    Prefer the largest L (lane-dense, unmasked vst) that still leaves
    P >= min_rows rows so the grid can be split deep enough for pipelining /
    both v7x TensorCores; otherwise fall back to the largest dividing L.
    `n` must already be a multiple of 128.
    """
    best_any = _LANE
    best_deep = None
    lanes = _LANE
    cap = min(n, 8192)
    while lanes <= cap:
        if n % lanes == 0:
            best_any = lanes
            if n // lanes >= min_rows:
                best_deep = lanes
        lanes += _LANE
    lanes = best_deep if best_deep is not None else best_any
    return n // lanes, lanes


def _choose_tile_rows(B, P, L, itemsize, target_bytes):
    """Rows per block: ~target_bytes per block, but never fewer than
    ceil(_MIN_TOTAL_STEPS / B) spatial tiles (pipeline depth / megacore),
    sublane-aligned for the dtype, and dividing P as evenly as possible."""
    align = _sublane_align(itemsize)
    if P <= align:
        return P  # single full-dim tile along P (block dim == array dim: legal)
    bytes_per_row = 3 * L * itemsize
    rows_for_target = max(1, target_bytes // bytes_per_row)
    tiles_for_target = -(-P // rows_for_target)
    tiles_for_depth = max(1, -(-_MIN_TOTAL_STEPS // B))
    num_tiles = max(tiles_for_target, tiles_for_depth)
    num_tiles = max(1, min(num_tiles, P // align))
    # Even, sublane-aligned split (floor keeps at least num_tiles tiles).
    tile_p = align * max(1, P // (align * num_tiles))
    return min(tile_p, P)


def rgb2ycbcr(img):
    if img.ndim != 4 or img.shape[1] != 3:
        raise ValueError(
            "Input image must be 4D tensor with a size of 3 in the second dimension.")
    B, _, H, W = img.shape
    itemsize = img.dtype.itemsize
    n = H * W

    # Flatten spatial dims and pad to a multiple of 128 so the last block dim
    # is always lane-dense (unmasked vst), even for awkward resolutions.
    pad = (-n) % _LANE
    x = img.reshape(B, 3, n)
    if pad:
        x = jnp.pad(x, ((0, 0), (0, 0), (0, pad)))
    padded_n = n + pad

    align = _sublane_align(itemsize)
    tiles_for_depth = max(1, -(-_MIN_TOTAL_STEPS // B))
    P, L = _choose_lane_layout(padded_n, align * tiles_for_depth)
    x = x.reshape(B, 3, P, L)

    # Generation-aware block sizing: ~8 MiB blocks on 128 MiB-VMEM parts
    # (v5e/v6e), ~4 MiB on v7x (64 MiB VMEM); 2x(in)+2x(out) buffers stay
    # comfortably under the explicit scoped-VMEM limit below.
    vmem_cap = _vmem_capacity_bytes()
    target_bytes = (8 << 20) if vmem_cap > (96 << 20) else (4 << 20)
    tile_p = _choose_tile_rows(B, P, L, itemsize, target_bytes)
    grid = (B, pl.cdiv(P, tile_p))

    block_bytes = 3 * tile_p * L * itemsize
    vmem_limit = int(min(max(32 << 20, 6 * block_bytes), int(vmem_cap * 0.7)))

    out = pl.pallas_call(
        _rgb2ycbcr_kernel,
        out_shape=jax.ShapeDtypeStruct((B, 3, P, L), img.dtype),
        grid=grid,
        in_specs=[
            pl.BlockSpec((None, 3, tile_p, L), lambda b, t: (b, 0, t, 0)),
        ],
        out_specs=pl.BlockSpec((None, 3, tile_p, L), lambda b, t: (b, 0, t, 0)),
        compiler_params=pltpu.CompilerParams(
            dimension_semantics=("parallel", "parallel"),
            vmem_limit_bytes=vmem_limit,
        ),
    )(x)

    out = out.reshape(B, 3, padded_n)
    if pad:
        out = out[:, :, :n]
    return out.reshape(B, 3, H, W)


def _reference(img):
    # Pure-JAX reference mirroring the PyTorch forward.
    m = jnp.array(_MATRIX, dtype=jnp.float32)
    shift = jnp.array(_SHIFT, dtype=jnp.float32)
    out = jnp.einsum("bchw,jc->bjhw", img.astype(jnp.float32), m)
    out = out + shift[None, :, None, None]
    return out.astype(img.dtype)


if __name__ == "__main__":
    key = jax.random.PRNGKey(0)
    k1, k2 = jax.random.split(key)

    # Lane-aligned spatial size.
    x = jax.random.uniform(k1, (2, 3, 16, 16), dtype=jnp.float32)
    y = rgb2ycbcr(x)
    jax.block_until_ready(y)
    assert y.shape == x.shape
    assert jnp.allclose(y, _reference(x), atol=1e-5, rtol=1e-5)

    # Awkward resolution: exercises the pad-to-128 lane path (no masked stores).
    x2 = jax.random.uniform(k2, (1, 3, 20, 20), dtype=jnp.float32)
    y2 = rgb2ycbcr(x2)
    jax.block_until_ready(y2)
    assert y2.shape == x2.shape
    assert jnp.allclose(y2, _reference(x2), atol=1e-5, rtol=1e-5)

    print("KERNEL_OK")
</pallas_src>

<mosaic_0001>
module attributes {stable_mosaic.version = 11 : i64} {
  func.func @_rgb2ycbcr_kernel(%arg0: i32, %arg1: i32, %arg2: memref<1x3x1x256xf32, #tpu.memory_space<vmem>>, %arg3: memref<1x3x1x256xf32, #tpu.memory_space<vmem>>) attributes {dimension_semantics = [#tpu.dimension_semantics<parallel>, #tpu.dimension_semantics<parallel>], iteration_bounds = array<i64: 2, 1>, scalar_prefetch = 0 : i64, scratch_operands = 0 : i64, tpu.core_type = #tpu.core_type<tc>, window_params = [{transform_indices = @transform_0, window_bounds = array<i64: 1, 3, 1, 256>}, {transform_indices = @transform_1, window_bounds = array<i64: 1, 3, 1, 256>}]} {
    %c0 = arith.constant 0 : index
    %c0_0 = arith.constant 0 : index
    %c0_1 = arith.constant 0 : index
    %c0_2 = arith.constant 0 : index
    %0 = vector.load %arg2[%c0, %c0_0, %c0_1, %c0_2] : memref<1x3x1x256xf32, #tpu.memory_space<vmem>>, vector<1x1x1x256xf32>
    %1 = vector.shape_cast %0 : vector<1x1x1x256xf32> to vector<1x256xf32>
    %c0_3 = arith.constant 0 : index
    %c1 = arith.constant 1 : index
    %c0_4 = arith.constant 0 : index
    %c0_5 = arith.constant 0 : index
    %2 = vector.load %arg2[%c0_3, %c1, %c0_4, %c0_5] : memref<1x3x1x256xf32, #tpu.memory_space<vmem>>, vector<1x1x1x256xf32>
    %3 = vector.shape_cast %2 : vector<1x1x1x256xf32> to vector<1x256xf32>
    %c0_6 = arith.constant 0 : index
    %c2 = arith.constant 2 : index
    %c0_7 = arith.constant 0 : index
    %c0_8 = arith.constant 0 : index
    %4 = vector.load %arg2[%c0_6, %c2, %c0_7, %c0_8] : memref<1x3x1x256xf32, #tpu.memory_space<vmem>>, vector<1x1x1x256xf32>
    %5 = vector.shape_cast %4 : vector<1x1x1x256xf32> to vector<1x256xf32>
    %cst = arith.constant 2.990000e-01 : f32
    %6 = vector.broadcast %cst : f32 to vector<1x256xf32>
    %7 = arith.mulf %6, %1 : vector<1x256xf32>
    %cst_9 = arith.constant 5.870000e-01 : f32
    %8 = vector.broadcast %cst_9 : f32 to vector<1x256xf32>
    %9 = arith.mulf %8, %3 : vector<1x256xf32>
    %10 = arith.addf %7, %9 : vector<1x256xf32>
    %cst_10 = arith.constant 1.140000e-01 : f32
    %11 = vector.broadcast %cst_10 : f32 to vector<1x256xf32>
    %12 = arith.mulf %11, %5 : vector<1x256xf32>
    %13 = arith.addf %10, %12 : vector<1x256xf32>
    %cst_11 = arith.constant 0.000000e+00 : f32
    %14 = vector.broadcast %cst_11 : f32 to vector<1x256xf32>
    %15 = arith.addf %13, %14 : vector<1x256xf32>
    %c0_12 = arith.constant 0 : index
    %c0_13 = arith.constant 0 : index
    %c0_14 = arith.constant 0 : index
    %c0_15 = arith.constant 0 : index
    %16 = vector.load %arg3[%c0_12, %c0_13, %c0_14, %c0_15] : memref<1x3x1x256xf32, #tpu.memory_space<vmem>>, vector<1x1x1x256xf32>
    %17 = vector.shape_cast %16 : vector<1x1x1x256xf32> to vector<1x256xf32>
    %18 = vector.shape_cast %15 : vector<1x256xf32> to vector<1x1x1x256xf32>
    tpu.vector_store %arg3[%c0_12, %c0_13, %c0_14, %c0_15], %18 {strides = array<i32>} : memref<1x3x1x256xf32, #tpu.memory_space<vmem>>, vector<1x1x1x256xf32>,
    %cst_16 = arith.constant -0.168735892 : f32
    %19 = vector.broadcast %cst_16 : f32 to vector<1x256xf32>
    %20 = arith.mulf %19, %1 : vector<1x256xf32>
    %cst_17 = arith.constant -0.331264108 : f32
    %21 = vector.broadcast %cst_17 : f32 to vector<1x256xf32>
    %22 = arith.mulf %21, %3 : vector<1x256xf32>
    %23 = arith.addf %20, %22 : vector<1x256xf32>
    %cst_18 = arith.constant 5.000000e-01 : f32
    %24 = vector.broadcast %cst_18 : f32 to vector<1x256xf32>
    %25 = arith.mulf %24, %5 : vector<1x256xf32>
    %26 = arith.addf %23, %25 : vector<1x256xf32>
    %cst_19 = arith.constant 5.000000e-01 : f32
    %27 = vector.broadcast %cst_19 : f32 to vector<1x256xf32>
    %28 = arith.addf %26, %27 : vector<1x256xf32>
    %c0_20 = arith.constant 0 : index
    %c1_21 = arith.constant 1 : index
    %c0_22 = arith.constant 0 : index
    %c0_23 = arith.constant 0 : index
    %29 = vector.load %arg3[%c0_20, %c1_21, %c0_22, %c0_23] : memref<1x3x1x256xf32, #tpu.memory_space<vmem>>, vector<1x1x1x256xf32>
    %30 = vector.shape_cast %29 : vector<1x1x1x256xf32> to vector<1x256xf32>
    %31 = vector.shape_cast %28 : vector<1x256xf32> to vector<1x1x1x256xf32>
    tpu.vector_store %arg3[%c0_20, %c1_21, %c0_22, %c0_23], %31 {strides = array<i32>} : memref<1x3x1x256xf32, #tpu.memory_space<vmem>>, vector<1x1x1x256xf32>,
    %cst_24 = arith.constant 5.000000e-01 : f32
    %32 = vector.broadcast %cst_24 : f32 to vector<1x256xf32>
    %33 = arith.mulf %32, %1 : vector<1x256xf32>
    %cst_25 = arith.constant -0.418687582 : f32
    %34 = vector.broadcast %cst_25 : f32 to vector<1x256xf32>
    %35 = arith.mulf %34, %3 : vector<1x256xf32>
    %36 = arith.addf %33, %35 : vector<1x256xf32>
    %cst_26 = arith.constant -0.0813124105 : f32
    %37 = vector.broadcast %cst_26 : f32 to vector<1x256xf32>
    %38 = arith.mulf %37, %5 : vector<1x256xf32>
    %39 = arith.addf %36, %38 : vector<1x256xf32>
    %cst_27 = arith.constant 5.000000e-01 : f32
    %40 = vector.broadcast %cst_27 : f32 to vector<1x256xf32>
    %41 = arith.addf %39, %40 : vector<1x256xf32>
    %c0_28 = arith.constant 0 : index
    %c2_29 = arith.constant 2 : index
    %c0_30 = arith.constant 0 : index
    %c0_31 = arith.constant 0 : index
    %42 = vector.load %arg3[%c0_28, %c2_29, %c0_30, %c0_31] : memref<1x3x1x256xf32, #tpu.memory_space<vmem>>, vector<1x1x1x256xf32>
    %43 = vector.shape_cast %42 : vector<1x1x1x256xf32> to vector<1x256xf32>
    %44 = vector.shape_cast %41 : vector<1x256xf32> to vector<1x1x1x256xf32>
    tpu.vector_store %arg3[%c0_28, %c2_29, %c0_30, %c0_31], %44 {strides = array<i32>} : memref<1x3x1x256xf32, #tpu.memory_space<vmem>>, vector<1x1x1x256xf32>,
    return
  }
  func.func @transform_0(%arg0: i32, %arg1: i32) -> (i32, i32, i32, i32) {
    %c0_i32 = arith.constant 0 : i32
    %c0_i32_0 = arith.constant 0 : i32
    %c0_i32_1 = arith.constant 0 : i32
    return %arg0, %c0_i32, %arg1, %c0_i32_0 : i32, i32, i32, i32
  }
  func.func @transform_1(%arg0: i32, %arg1: i32) -> (i32, i32, i32, i32) {
    %c0_i32 = arith.constant 0 : i32
    %c0_i32_0 = arith.constant 0 : i32
    %c0_i32_1 = arith.constant 0 : i32
    return %arg0, %c0_i32, %arg1, %c0_i32_0 : i32, i32, i32, i32
  }
}

</mosaic_0001>

<llo_original>
// kernel: tpu_custom_call.1
$region0: #{tpu_custom_call.1}
  #allocation0 [shape = 'u32[]', space=smem, size = 0x4, offset = 0x4, fixed_abs, tag = 'smem constant byte address 0x4 - core index']
  #allocation1 [shape = 'u32[144,128]{1,0:T(1,128)}', space=vmem, size = 0x12000, scoped, tag = 'internal scratch']
  %s0 = inlined_call_operand.hbm [shape: f32[2,3,1,256], index: 0, kind: input, shape index: {}]
  %s1 = inlined_call_operand.hbm [shape: f32[2,3,1,256], index: 1, kind: output, shape index: {}]
  %s2 = sld [smem:[#allocation0]]
  $region41: #{tpu_custom_call.1} parent=0
    _
  %s4 = ssub.s32 1, %s2
  %s5 = scalar_select 0, %s4, %s2
  $region1: #{tpu_custom_call.1} parent=0
    #allocation2 [shape = 'u8[6144]{0}', space=vmem, size = 0x1800, scoped, tag = 'input window, operand 0']
    #allocation3 [shape = 's32[2]{0}', space=sflag, size = 0x8, scoped, tag = 'scoped memory for tpu_custom_call.1']
    #allocation4 [shape = 's32[2]{0}', space=sflag, size = 0x8, scoped, tag = 'scoped memory for tpu_custom_call.1']
    #allocation5 [shape = 'u8[6144]{0}', space=vmem, size = 0x1800, scoped, tag = 'output window, operand 0']
    %6 = vsyncpa [#allocation3], 0
    %s7 = scalar_lea.sflag [#allocation3], 1
    %8 = vsyncpa %s7, 0
    %9 = vsyncpa [#allocation4], 0
    %s10 = scalar_lea.sflag [#allocation4], 1
    %11 = vsyncpa %s10, 0
    loop: start=0, step=1, limit=4
    $region2: #{tpu_custom_call.1} parent=1 // loop_pre_header
      _
    $region3: #{tpu_custom_call.1} parent=1 // loop_header
      %s13 = sphi 0, %s17
      %p14 = scmp.ge.s32.totalorder %s13, 4
      %s20 = sphi 0, %s32
      %s21 = sphi 0, %s28
      %s22 = sphi 0, %s20
      %s23 = sphi 0, %s21
      %s24 = sphi 0, %s22
      %s25 = sphi 0, %s23
      %s37 = sphi 0, %s39
      %s40 = sphi 0, %s37
      %s41 = sphi 0, %s40
      %s57 = sphi 0, %s41
      %s65 = sphi 0, %s67
      %s68 = sphi 0, %s65
      %s69 = sphi 0, %s68
      %s85 = sphi 0, %s69
    $region4: #{tpu_custom_call.1} parent=1 // loop_header_branch
      %16 = sbr.rel (%p14) target = $region8
    $region5: #{tpu_custom_call.1} parent=1 // loop_body
      %s18 = ssub.s32 %s13, 1
      %s19 = ssub.s32 %s13, 2
      %s26 = sadd.s32 1, %s21
      %p27 = scmp.ge.s32.totalorder %s26, 1
      %s28 = scalar_select %p27, 0, %s26
      %s29 = sadd.s32 1, %s20
      %s30 = scalar_select %p27, %s29, %s20
      %p31 = scmp.ge.s32.totalorder %s30, 2
      %s32 = scalar_select %p31, 0, %s30
      %s33 = ssub.s32 %s20, %s32
      %s34 = ssub.s32 %s21, %s28
      %s35 = sor.u32 %s33, %s34
      %p36 = scmp.eq.s32.totalorder %s35, 0
      %s38 = sadd.s32 %s37, 1
      %s39 = scalar_select %p36, %s37, %s38
      %p42 = pneg %p36
      %p43 = scmp.eq.s32.totalorder %s13, 1
      %p44 = por %p42, %p43
      %p45 = scmp.ne.s32.totalorder %s37, %s40
      %p46 = scmp.eq.s32.totalorder %s13, 0
      %p47 = por %p45, %p46
      %p48 = scmp.ne.s32.totalorder %s37, %s40
      %p49 = scmp.eq.s32.totalorder %s18, 1
      %p50 = por %p48, %p49
      %p51 = scmp.ne.s32.totalorder %s40, %s41
      %p52 = scmp.eq.s32.totalorder %s18, 0
      %p53 = por %p51, %p52
      %p54 = scmp.ne.s32.totalorder %s40, %s41
      %p55 = scmp.eq.s32.totalorder %s19, 1
      %p56 = por %p54, %p55
      %p58 = scmp.ne.s32.totalorder %s41, %s57
      %p59 = scmp.eq.s32.totalorder %s19, 0
      %p60 = por %p58, %p59
      %s61 = ssub.s32 %s20, %s32
      %s62 = ssub.s32 %s21, %s28
      %s63 = sor.u32 %s61, %s62
      %p64 = scmp.eq.s32.totalorder %s63, 0
      %s66 = sadd.s32 %s65, 1
      %s67 = scalar_select %p64, %s65, %s66
      %p70 = pneg %p64
      %p71 = scmp.eq.s32.totalorder %s13, 1
      %p72 = por %p70, %p71
      %p73 = scmp.ne.s32.totalorder %s65, %s68
      %p74 = scmp.eq.s32.totalorder %s13, 0
      %p75 = por %p73, %p74
      %p76 = scmp.ne.s32.totalorder %s65, %s68
      %p77 = scmp.eq.s32.totalorder %s18, 1
      %p78 = por %p76, %p77
      %p79 = scmp.ne.s32.totalorder %s68, %s69
      %p80 = scmp.eq.s32.totalorder %s18, 0
      %p81 = por %p79, %p80
      %p82 = scmp.ne.s32.totalorder %s68, %s69
      %p83 = scmp.eq.s32.totalorder %s19, 1
      %p84 = por %p82, %p83
      %p86 = scmp.ne.s32.totalorder %s69, %s85
      %p87 = scmp.eq.s32.totalorder %s19, 0
      %p88 = por %p86, %p87
      %p89 = scmp.le.s32.totalorder 1, %s13
      %p90 = scmp.lt.s32.totalorder %s13, 3
      %p91 = pnand %p89, %p90
      %p92 = pneg %p91
      // Predicated region
      $region9: #{tpu_custom_call.1} parent=5 // pred_check
        _
      $region10: #{tpu_custom_call.1} parent=5 // pred_check_branch
        %94 = sbr.rel (%p91) target = $region12
      $region11: #{tpu_custom_call.1} parent=5 // pred_region
        %s95 = ssub.s32 %s13, 1
      $region12: #{tpu_custom_call.1} parent=5 // pred_fallthru
        _
      %p96 = scmp.lt.s32.totalorder %s13, 2
      // Predicated region
      $region13: #{tpu_custom_call.1} parent=5 // pred_check
        %p97 = pneg %p96
      $region14: #{tpu_custom_call.1} parent=5 // pred_check_branch
        %99 = sbr.rel (%p97) target = $region16
      $region15: #{tpu_custom_call.1} parent=5 // pred_region
        // Predicated region
        $region17: #{tpu_custom_call.1} parent=15 // pred_check
          %p100 = pneg %p47
        $region18: #{tpu_custom_call.1} parent=15 // pred_check_branch
          %102 = sbr.rel (%p100) target = $region20
        $region19: #{tpu_custom_call.1} parent=15 // pred_region
          %s103 = sand.u32 %s37, 1
          %s104 = scalar_lea.sflag [#allocation3], %s103
          %s105 = sand.u32 %s37, 1
          %s106 = smul.addr %s105, 6
          %s107 = scalar_lea.vmem [#allocation2], %s106
          %s109 = ssub.s32 96, 96
          %110 = vsyncadd %s104, %s109
          %s111 = smul.addr %s21, 2
          %s112 = smul.addr %s20, 6
          %s113 = sadd.s32 %s111, %s112
          %s114 = smul.addr %s113, 16
          %s115 = scalar_lea.hbm %s0, %s114
          %s116 = sshll.u32 %s107, 4
          %s117 = int_to_ptr.vmem [resolvable:$true] %s116
          %122 = dma.hbm_to_vmem [thread:$0]  %s115, 96, %s117, %s104, 32, 32, 2
        $region20: #{tpu_custom_call.1} parent=15 // pred_fallthru
          _
      $region16: #{tpu_custom_call.1} parent=5 // pred_fallthru
        _
      %p123 = scmp.le.s32.totalorder 1, %s13
      %p124 = scmp.lt.s32.totalorder %s13, 3
      %p125 = pnand %p123, %p124
      %p126 = pneg %p125
      // Predicated region
      $region21: #{tpu_custom_call.1} parent=5 // pred_check
        _
      $region22: #{tpu_custom_call.1} parent=5 // pred_check_branch
        %128 = sbr.rel (%p125) target = $region24
      $region23: #{tpu_custom_call.1} parent=5 // pred_region
        %s129 = ssub.s32 %s13, 1
        %s130 = sand.u32 %s40, 1
        %s131 = scalar_lea.sflag [#allocation3], %s130
        %s132 = sand.u32 %s40, 1
        %s133 = smul.addr %s132, 6
        %s134 = scalar_lea.vmem [#allocation2], %s133
        // Predicated region
        $region25: #{tpu_custom_call.1} parent=23 // pred_check
          %p135 = pneg %p53
        $region26: #{tpu_custom_call.1} parent=23 // pred_check_branch
          %137 = sbr.rel (%p135) target = $region28
        $region27: #{tpu_custom_call.1} parent=23 // pred_region
          %138 = dma.done %s131, 96
        $region28: #{tpu_custom_call.1} parent=23 // pred_fallthru
          _
        %s139 = sand.u32 %s40, 1
        %s140 = scalar_lea.sflag [#allocation3], %s139
        %s141 = sand.u32 %s40, 1
        %s142 = smul.addr %s141, 6
        %s143 = scalar_lea.vmem [#allocation2], %s142
        %p144 = pneg %p53
        %p145 = pneg %p50
        %p146 = pneg %p81
        %p147 = pneg %p78
        %s148 = sand.u32 %s68, 1
        %s149 = scalar_lea.sflag [#allocation4], %s148
        %s150 = sand.u32 %s68, 1
        %s151 = smul.addr %s150, 6
        %s152 = scalar_lea.vmem [#allocation5], %s151
        %v153 = vld [vmem:[%s134] sm:$0x3]
        %s154 = scalar_lea.vmem %s134, 2 [#allocation2]
        %v155 = vld [vmem:[%s154] sm:$0x3]
        %s156 = scalar_lea.vmem %s134, 4 [#allocation2]
        %v157 = vld [vmem:[%s156] sm:$0x3]
        %v158 = vmul.f32 %v153, 0.299
        %v159 = vmul.f32 %v155, 0.587
        %v160 = vadd.f32 %v158, %v159
        %v161 = vmul.f32 %v157, 0.114
        %v162 = vadd.f32 %v160, %v161
        %v163 = vadd.f32 %v162, 0.0
        %v164 = vlaneseq
        %vm165 = vcmp.ge.s32.totalorder %v164, 0
        %vm166 = vcmp.lt.s32.totalorder %v164, 256
        %vm167 = vmand %vm165, %vm166
        %168 = vst.msk [vmem:[%s152] sm:$0x3] %vm167, %v163
        %v169 = vmul.f32 %v153, -0.16873589
        %v170 = vmul.f32 %v155, -0.3312641
        %v171 = vadd.f32 %v169, %v170
        %v172 = vmul.f32 %v157, 0.5
        %v173 = vadd.f32 %v171, %v172
        %v174 = vadd.f32 %v173, 0.5
        %s175 = scalar_lea.vmem %s152, 2 [#allocation5]
        %176 = vst.msk [vmem:[%s175] sm:$0x3] %vm167, %v174
        %v177 = vmul.f32 %v153, 0.5
        %v178 = vmul.f32 %v155, -0.41868758
        %v179 = vadd.f32 %v177, %v178
        %v180 = vmul.f32 %v157, -0.08131241
        %v181 = vadd.f32 %v179, %v180
        %v182 = vadd.f32 %v181, 0.5
        %s183 = scalar_lea.vmem %s152, 4 [#allocation5]
        %184 = vst.msk [vmem:[%s183] sm:$0x3] %vm167, %v182
        %s185 = sand.u32 %s68, 1
        %s186 = scalar_lea.sflag [#allocation4], %s185
        %s187 = sand.u32 %s68, 1
        %s188 = smul.addr %s187, 6
        %s189 = scalar_lea.vmem [#allocation5], %s188
        // Predicated region
        $region29: #{tpu_custom_call.1} parent=23 // pred_check
          %p190 = pneg %p78
        $region30: #{tpu_custom_call.1} parent=23 // pred_check_branch
          %192 = sbr.rel (%p190) target = $region32
        $region31: #{tpu_custom_call.1} parent=23 // pred_region
          %s194 = ssub.s32 96, 96
          %195 = vsyncadd %s186, %s194
          %s196 = smul.addr %s23, 2
          %s197 = smul.addr %s22, 6
          %s198 = sadd.s32 %s196, %s197
          %s199 = smul.addr %s198, 16
          %s200 = scalar_lea.hbm %s1, %s199
          %s201 = sshll.u32 %s189, 4
          %s202 = int_to_ptr.vmem [resolvable:$true] %s201
          %207 = dma.vmem_to_hbm [thread:$0]  %s202, 96, %s200, %s186, 32, 32, 2
        $region32: #{tpu_custom_call.1} parent=23 // pred_fallthru
          _
      $region24: #{tpu_custom_call.1} parent=5 // pred_fallthru
        _
      %p208 = scmp.le.s32.totalorder 2, %s13
      // Predicated region
      $region33: #{tpu_custom_call.1} parent=5 // pred_check
        %p209 = pneg %p208
      $region34: #{tpu_custom_call.1} parent=5 // pred_check_branch
        %211 = sbr.rel (%p209) target = $region36
      $region35: #{tpu_custom_call.1} parent=5 // pred_region
        %s212 = ssub.s32 %s13, 2
        // Predicated region
        $region37: #{tpu_custom_call.1} parent=35 // pred_check
          %p213 = pneg %p84
        $region38: #{tpu_custom_call.1} parent=35 // pred_check_branch
          %215 = sbr.rel (%p213) target = $region40
        $region39: #{tpu_custom_call.1} parent=35 // pred_region
          %s216 = sand.u32 %s69, 1
          %s217 = scalar_lea.sflag [#allocation4], %s216
          %s218 = sand.u32 %s69, 1
          %s219 = smul.addr %s218, 6
          %s220 = scalar_lea.vmem [#allocation5], %s219
          %221 = dma.done %s217, 96
        $region40: #{tpu_custom_call.1} parent=35 // pred_fallthru
          _
      $region36: #{tpu_custom_call.1} parent=5 // pred_fallthru
        _
    $region6: #{tpu_custom_call.1} parent=1 // loop_footer
      %s17 = sadd.s32 1, %s13
    $region7: #{tpu_custom_call.1} parent=1 // loop_footer_branch
      %12 = sbr.rel target = $region3
    $region8: #{tpu_custom_call.1} parent=1 // loop_exit
      _
    %222 = vsyncpa [#allocation3], 1
    %s223 = scalar_lea.sflag [#allocation3], 1
    %224 = vsyncpa %s223, 1
    %225 = vsyncpa [#allocation4], 1
    %s226 = scalar_lea.sflag [#allocation4], 1
    %227 = vsyncpa %s226, 1

</llo_original>
